<compile_context>
chip_gen: v5e
topology: v5e:2x2
jax: 0.10.0
libtpu: 0.0.40
codegen_flags: <defaults>
</compile_context>

<pallas_src>
import jax
import jax.numpy as jnp
from jax import lax
from jax.experimental import pallas as pl
from jax.experimental.pallas import tpu as pltpu


# ---------------------------------------------------------------------------
# Kernel 1: fused QKV projection.
#   x_ref: (1, tm, C)   w_ref: (C, 3H) = [Wq*scale | Wk | Wv]
#   q_ref/k_ref/v_ref: (1, tm, H)
# ---------------------------------------------------------------------------
def _qkv_proj_kernel(x_ref, w_ref, q_ref, k_ref, v_ref):
    H = q_ref.shape[-1]
    x = x_ref[0]                                    # keep input dtype for MXU
    qkv = jnp.dot(x, w_ref[...], preferred_element_type=jnp.float32)  # (tm,3H)
    q_ref[0] = qkv[:, :H].astype(q_ref.dtype)
    k_ref[0] = qkv[:, H:2 * H].astype(k_ref.dtype)
    v_ref[0] = qkv[:, 2 * H:].astype(v_ref.dtype)


# ---------------------------------------------------------------------------
# Kernel 2: causal flash attention with online softmax.
#   grid = (B, T//tq, T//tk); kv axis last ("arbitrary"), output revisited.
# ---------------------------------------------------------------------------
def _flash_attn_kernel(q_ref, k_ref, v_ref, o_ref, m_s, l_s, acc_s):
    qi = pl.program_id(1)
    ki = pl.program_id(2)
    nk = pl.num_programs(2)
    tq = q_ref.shape[1]
    tk = k_ref.shape[1]

    @pl.when(ki == 0)
    def _init():
        m_s[...] = jnp.full_like(m_s, -jnp.inf)
        l_s[...] = jnp.zeros_like(l_s)
        acc_s[...] = jnp.zeros_like(acc_s)

    q_start = qi * tq
    k_start = ki * tk

    def _attend(apply_mask):
        q = q_ref[0]                                # (tq, H)
        k = k_ref[0]                                # (tk, H)
        v = v_ref[0]                                # (tk, H)
        # QK^T with no explicit transpose: contract the last dims directly.
        s = lax.dot_general(q, k, (((1,), (1,)), ((), ())),
                            preferred_element_type=jnp.float32)   # (tq, tk)
        if apply_mask:                              # only on diagonal blocks
            row = q_start + lax.broadcasted_iota(jnp.int32, (tq, tk), 0)
            col = k_start + lax.broadcasted_iota(jnp.int32, (tq, tk), 1)
            s = jnp.where(col <= row, s, -jnp.inf)
        m_prev = m_s[...]                                          # (tq, 1)
        m_new = jnp.maximum(m_prev, jnp.max(s, axis=-1, keepdims=True))
        alpha = jnp.exp(m_prev - m_new)
        p = jnp.exp(s - m_new)
        l_s[...] = alpha * l_s[...] + jnp.sum(p, axis=-1, keepdims=True)
        acc_s[...] = alpha * acc_s[...] + jnp.dot(
            p.astype(v.dtype), v, preferred_element_type=jnp.float32)
        m_s[...] = m_new

    # Block-level causal structure (static tile sizes, traced tile offsets):
    #   fully below diagonal  -> no mask needed
    #   straddles diagonal    -> apply iota mask
    #   fully above diagonal  -> skip entirely (no matmuls; the clamped K/V
    #                            index_maps already avoided the DMA)
    fully_unmasked = k_start + (tk - 1) <= q_start
    is_diagonal = jnp.logical_and(k_start <= q_start + (tq - 1),
                                  jnp.logical_not(fully_unmasked))

    @pl.when(fully_unmasked)
    def _():
        _attend(apply_mask=False)

    @pl.when(is_diagonal)
    def _():
        _attend(apply_mask=True)

    @pl.when(ki == nk - 1)
    def _finalize():
        inv_l = pl.reciprocal(l_s[...], approx=True)
        o_ref[0] = (acc_s[...] * inv_l).astype(o_ref.dtype)


# ---------------------------------------------------------------------------
# Wrapper
# ---------------------------------------------------------------------------
def head_forward(x, wq, wk, wv, *, block_q=128, block_k=128, block_m=128):
    """Single-head causal self-attention (eval mode).

    Args:
      x:  [B, T, C] activations.
      wq, wk, wv: [C, H] projection weights (q = x @ wq, etc.).
    Returns:
      [B, T, H] attention output.
    """
    B, T, C = x.shape
    H = wq.shape[1]

    # Fold the 1/sqrt(head_size) scale into Wq and fuse the three projections
    # into one (C, 3H) weight -> one wide MXU matmul instead of three narrow.
    scale = 1.0 / (H ** 0.5)
    w_qkv = jnp.concatenate([wq * scale, wk, wv], axis=1)       # (C, 3H)

    def _tile(t):
        t = min(t, T)
        assert T % t == 0, f"T={T} must be divisible by tile {t}"
        assert t % 8 == 0, f"tile {t} must be a multiple of 8"
        return t

    tm = _tile(block_m)
    tq = _tile(block_q)
    tk = _tile(block_k)

    # --- fused QKV projection --------------------------------------------
    q, k, v = pl.pallas_call(
        _qkv_proj_kernel,
        out_shape=(
            jax.ShapeDtypeStruct((B, T, H), x.dtype),
            jax.ShapeDtypeStruct((B, T, H), x.dtype),
            jax.ShapeDtypeStruct((B, T, H), x.dtype),
        ),
        grid_spec=pltpu.PrefetchScalarGridSpec(
            num_scalar_prefetch=0,
            grid=(B, T // tm),
            in_specs=[
                pl.BlockSpec((1, tm, C), lambda b, i: (b, i, 0)),
                pl.BlockSpec((C, 3 * H), lambda b, i: (0, 0)),   # resident weight
            ],
            out_specs=[
                pl.BlockSpec((1, tm, H), lambda b, i: (b, i, 0)),
                pl.BlockSpec((1, tm, H), lambda b, i: (b, i, 0)),
                pl.BlockSpec((1, tm, H), lambda b, i: (b, i, 0)),
            ],
        ),
        compiler_params=pltpu.CompilerParams(
            dimension_semantics=("parallel", "parallel")),
    )(x, w_qkv)

    # --- flash attention ---------------------------------------------------
    # K/V index maps clamp the kv-block index to the last block that is not
    # fully masked for this q tile; since the clamped index equals the index
    # of the previous grid step, the pipeline skips the DMA entirely for the
    # masked upper-triangle blocks (compute is skipped via pl.when).
    def _kv_index_map(b, qi, ki):
        last_needed = ((qi + 1) * tq - 1) // tk
        return (b, jnp.minimum(ki, last_needed), 0)

    # TODO(synk): for multi-head use, pack heads so the output last dim is a
    # multiple of 128 (lane-dense stores / wider MXU N); a single head of
    # size H keeps the last dim at H by construction.
    out = pl.pallas_call(
        _flash_attn_kernel,
        out_shape=jax.ShapeDtypeStruct((B, T, H), x.dtype),
        grid_spec=pltpu.PrefetchScalarGridSpec(
            num_scalar_prefetch=0,
            grid=(B, T // tq, T // tk),
            in_specs=[
                pl.BlockSpec((1, tq, H), lambda b, qi, ki: (b, qi, 0)),
                pl.BlockSpec((1, tk, H), _kv_index_map),
                pl.BlockSpec((1, tk, H), _kv_index_map),
            ],
            out_specs=pl.BlockSpec((1, tq, H), lambda b, qi, ki: (b, qi, 0)),
            scratch_shapes=[
                pltpu.VMEM((tq, 1), jnp.float32),   # running max
                pltpu.VMEM((tq, 1), jnp.float32),   # running sum
                pltpu.VMEM((tq, H), jnp.float32),   # output accumulator
            ],
        ),
        compiler_params=pltpu.CompilerParams(
            dimension_semantics=("parallel", "parallel", "arbitrary")),
    )(q, k, v)

    return out


def head_reference(x, wq, wk, wv):
    """Pure-JAX reference matching the PyTorch forward (eval mode)."""
    B, T, C = x.shape
    H = wq.shape[1]
    q = x @ wq
    k = x @ wk
    v = x @ wv
    wei = (q @ jnp.swapaxes(k, -2, -1)) / (H ** 0.5)
    mask = jnp.tril(jnp.ones((T, T), dtype=bool))
    wei = jnp.where(mask[None, :, :], wei, -jnp.inf)
    wei = jax.nn.softmax(wei, axis=-1)
    return wei @ v


if __name__ == "__main__":
    # Shapes from the module spec: EMBED_SIZE=384, SEQ_LEN=256; head_size=64
    # (EMBED_SIZE / 6 heads), batch of 2.
    B, T, C, H = 2, 256, 384, 64

    key = jax.random.PRNGKey(0)
    kx, kq, kk, kv = jax.random.split(key, 4)

    x = jax.random.normal(kx, (B, T, C), dtype=jnp.float32)
    # nn.Linear default init ~ U(-1/sqrt(C), 1/sqrt(C)); deterministic here.
    bound = 1.0 / (C ** 0.5)
    wq = jax.random.uniform(kq, (C, H), jnp.float32, -bound, bound)
    wk = jax.random.uniform(kk, (C, H), jnp.float32, -bound, bound)
    wv = jax.random.uniform(kv, (C, H), jnp.float32, -bound, bound)

    out = head_forward(x, wq, wk, wv)
    out = jax.block_until_ready(out)

    ref = head_reference(x, wq, wk, wv)
    assert out.shape == (B, T, H)
    max_err = float(jnp.max(jnp.abs(out - ref)))
    # Tolerance accommodates the approx-reciprocal softmax normalization.
    assert jnp.allclose(out, ref, atol=2e-3, rtol=2e-3), f"mismatch: {max_err}"

    print("KERNEL_OK")
</pallas_src>

<mosaic_0001>
module attributes {stable_mosaic.version = 11 : i64} {
  func.func @_qkv_proj_kernel(%arg0: i32, %arg1: i32, %arg2: memref<1x128x384xf32, #tpu.memory_space<vmem>>, %arg3: memref<384x192xf32, #tpu.memory_space<vmem>>, %arg4: memref<1x128x64xf32, #tpu.memory_space<vmem>>, %arg5: memref<1x128x64xf32, #tpu.memory_space<vmem>>, %arg6: memref<1x128x64xf32, #tpu.memory_space<vmem>>) attributes {dimension_semantics = [#tpu.dimension_semantics<parallel>, #tpu.dimension_semantics<parallel>], iteration_bounds = array<i64: 2, 2>, scalar_prefetch = 0 : i64, scratch_operands = 0 : i64, tpu.core_type = #tpu.core_type<tc>, window_params = [{transform_indices = @transform_0, window_bounds = array<i64: 1, 128, 384>}, {pipeline_mode = #tpu.pipeline_mode<synchronous>, transform_indices = @transform_1, window_bounds = array<i64: 384, 192>}, {transform_indices = @transform_2, window_bounds = array<i64: 1, 128, 64>}, {transform_indices = @transform_3, window_bounds = array<i64: 1, 128, 64>}, {transform_indices = @transform_4, window_bounds = array<i64: 1, 128, 64>}]} {
    %c0 = arith.constant 0 : index
    %c0_0 = arith.constant 0 : index
    %c0_1 = arith.constant 0 : index
    %0 = vector.load %arg2[%c0, %c0_0, %c0_1] : memref<1x128x384xf32, #tpu.memory_space<vmem>>, vector<1x128x384xf32>
    %1 = vector.shape_cast %0 : vector<1x128x384xf32> to vector<128x384xf32>
    %c0_2 = arith.constant 0 : index
    %c0_3 = arith.constant 0 : index
    %2 = vector.load %arg3[%c0_2, %c0_3] : memref<384x192xf32, #tpu.memory_space<vmem>>, vector<384x192xf32>
    %cst = arith.constant dense<0.000000e+00> : vector<128x192xf32>
    %3 = tpu.matmul %1, %2, %cst {dimension_numbers = #tpu.dot_dimension_numbers<[1], [0], [0], [1], [0, 0, 1, 1], [], []>} : vector<128x384xf32>, vector<384x192xf32>, vector<128x192xf32> -> vector<128x192xf32>
    %4 = vector.extract_strided_slice %3 {offsets = [0, 0], sizes = [128, 64], strides = [1, 1]} : vector<128x192xf32> to vector<128x64xf32>
    %c0_4 = arith.constant 0 : index
    %c0_5 = arith.constant 0 : index
    %c0_6 = arith.constant 0 : index
    %5 = vector.load %arg4[%c0_4, %c0_5, %c0_6] : memref<1x128x64xf32, #tpu.memory_space<vmem>>, vector<1x128x64xf32>
    %6 = vector.shape_cast %5 : vector<1x128x64xf32> to vector<128x64xf32>
    %7 = vector.shape_cast %4 : vector<128x64xf32> to vector<1x128x64xf32>
    tpu.vector_store %arg4[%c0_4, %c0_5, %c0_6], %7 {strides = array<i32>} : memref<1x128x64xf32, #tpu.memory_space<vmem>>, vector<1x128x64xf32>,
    %8 = vector.extract_strided_slice %3 {offsets = [0, 64], sizes = [128, 64], strides = [1, 1]} : vector<128x192xf32> to vector<128x64xf32>
    %c0_7 = arith.constant 0 : index
    %c0_8 = arith.constant 0 : index
    %c0_9 = arith.constant 0 : index
    %9 = vector.load %arg5[%c0_7, %c0_8, %c0_9] : memref<1x128x64xf32, #tpu.memory_space<vmem>>, vector<1x128x64xf32>
    %10 = vector.shape_cast %9 : vector<1x128x64xf32> to vector<128x64xf32>
    %11 = vector.shape_cast %8 : vector<128x64xf32> to vector<1x128x64xf32>
    tpu.vector_store %arg5[%c0_7, %c0_8, %c0_9], %11 {strides = array<i32>} : memref<1x128x64xf32, #tpu.memory_space<vmem>>, vector<1x128x64xf32>,
    %12 = vector.extract_strided_slice %3 {offsets = [0, 128], sizes = [128, 64], strides = [1, 1]} : vector<128x192xf32> to vector<128x64xf32>
    %c0_10 = arith.constant 0 : index
    %c0_11 = arith.constant 0 : index
    %c0_12 = arith.constant 0 : index
    %13 = vector.load %arg6[%c0_10, %c0_11, %c0_12] : memref<1x128x64xf32, #tpu.memory_space<vmem>>, vector<1x128x64xf32>
    %14 = vector.shape_cast %13 : vector<1x128x64xf32> to vector<128x64xf32>
    %15 = vector.shape_cast %12 : vector<128x64xf32> to vector<1x128x64xf32>
    tpu.vector_store %arg6[%c0_10, %c0_11, %c0_12], %15 {strides = array<i32>} : memref<1x128x64xf32, #tpu.memory_space<vmem>>, vector<1x128x64xf32>,
    return
  }
  func.func @transform_0(%arg0: i32, %arg1: i32) -> (i32, i32, i32) {
    %c0_i32 = arith.constant 0 : i32
    %c0_i32_0 = arith.constant 0 : i32
    return %arg0, %arg1, %c0_i32 : i32, i32, i32
  }
  func.func @transform_1(%arg0: i32, %arg1: i32) -> (i32, i32) {
    %c0_i32 = arith.constant 0 : i32
    %c0_i32_0 = arith.constant 0 : i32
    %c0_i32_1 = arith.constant 0 : i32
    return %c0_i32, %c0_i32_0 : i32, i32
  }
  func.func @transform_2(%arg0: i32, %arg1: i32) -> (i32, i32, i32) {
    %c0_i32 = arith.constant 0 : i32
    %c0_i32_0 = arith.constant 0 : i32
    return %arg0, %arg1, %c0_i32 : i32, i32, i32
  }
  func.func @transform_3(%arg0: i32, %arg1: i32) -> (i32, i32, i32) {
    %c0_i32 = arith.constant 0 : i32
    %c0_i32_0 = arith.constant 0 : i32
    return %arg0, %arg1, %c0_i32 : i32, i32, i32
  }
  func.func @transform_4(%arg0: i32, %arg1: i32) -> (i32, i32, i32) {
    %c0_i32 = arith.constant 0 : i32
    %c0_i32_0 = arith.constant 0 : i32
    return %arg0, %arg1, %c0_i32 : i32, i32, i32
  }
}

</mosaic_0001>

<llo_original>
// kernel: tpu_custom_call.1
$region0: #{tpu_custom_call.1}
  #allocation0 [shape = 'u32[]', space=smem, size = 0x4, offset = 0x4, fixed_abs, tag = 'smem constant byte address 0x4 - core index']
  #allocation1 [shape = 'u32[72,128]{1,0:T(1,128)}', space=vmem, size = 0x9000, scoped, tag = 'internal scratch']
  %s0 = inlined_call_operand.hbm [shape: f32[2,256,384], index: 0, kind: input, shape index: {}]
  %s1 = inlined_call_operand.vmem [shape: f32[384,192], index: 1, kind: input, shape index: {}]
  %s2 = inlined_call_operand.vmem [shape: f32[2,256,64], index: 2, kind: output, shape index: {0}]
  %s3 = inlined_call_operand.vmem [shape: f32[2,256,64], index: 3, kind: output, shape index: {1}]
  %s4 = inlined_call_operand.vmem [shape: f32[2,256,64], index: 4, kind: output, shape index: {2}]
  %5 = xla_tuple %s2, %s3, %s4
  %s6 = sld [smem:[#allocation0]]
  $region61: #{tpu_custom_call.1} parent=0
    _
  %s8 = ssub.s32 1, %s6
  %s9 = scalar_select 0, %s8, %s6
  $region1: #{tpu_custom_call.1} parent=0
    #allocation2 [shape = 'u8[393216]{0}', space=vmem, size = 0x60000, scoped, tag = 'input window, operand 0']
    #allocation3 [shape = 's32[2]{0}', space=sflag, size = 0x8, scoped, tag = 'scoped memory for tpu_custom_call.1']
    %10 = vsyncpa [#allocation3], 0
    %s11 = scalar_lea.sflag [#allocation3], 1
    %12 = vsyncpa %s11, 0
    loop: start=0, step=1, limit=6
    $region2: #{tpu_custom_call.1} parent=1 // loop_pre_header
      _
    $region3: #{tpu_custom_call.1} parent=1 // loop_header
      %s14 = sphi 0, %s18
      %p15 = scmp.ge.s32.totalorder %s14, 6
      %s21 = sphi 0, %s33
      %s22 = sphi 0, %s29
      %s23 = sphi 0, %s21
      %s24 = sphi 0, %s22
      %s25 = sphi 0, %s23
      %s26 = sphi 0, %s24
      %s38 = sphi 0, %s40
      %s41 = sphi 0, %s38
      %s42 = sphi 0, %s41
      %s58 = sphi 0, %s42
      %s62 = sphi 0, %s62
      %s64 = sphi 0, %s62
      %s65 = sphi 0, %s64
      %s79 = sphi 0, %s65
      %s87 = sphi 0, %s89
      %s90 = sphi 0, %s87
      %s91 = sphi 0, %s90
      %s107 = sphi 0, %s91
      %s115 = sphi 0, %s117
      %s118 = sphi 0, %s115
      %s119 = sphi 0, %s118
      %s135 = sphi 0, %s119
      %s143 = sphi 0, %s145
      %s146 = sphi 0, %s143
      %s147 = sphi 0, %s146
      %s163 = sphi 0, %s147
    $region4: #{tpu_custom_call.1} parent=1 // loop_header_branch
      %17 = sbr.rel (%p15) target = $region8
    $region5: #{tpu_custom_call.1} parent=1 // loop_body
      %s19 = ssub.s32 %s14, 1
      %s20 = ssub.s32 %s14, 2
      %s27 = sadd.s32 1, %s22
      %p28 = scmp.ge.s32.totalorder %s27, 2
      %s29 = scalar_select %p28, 0, %s27
      %s30 = sadd.s32 1, %s21
      %s31 = scalar_select %p28, %s30, %s21
      %p32 = scmp.ge.s32.totalorder %s31, 2
      %s33 = scalar_select %p32, 0, %s31
      %s34 = ssub.s32 %s21, %s33
      %s35 = ssub.s32 %s22, %s29
      %s36 = sor.u32 %s34, %s35
      %p37 = scmp.eq.s32.totalorder %s36, 0
      %s39 = sadd.s32 %s38, 1
      %s40 = scalar_select %p37, %s38, %s39
      %p43 = pneg %p37
      %p44 = scmp.eq.s32.totalorder %s14, 3
      %p45 = por %p43, %p44
      %p46 = scmp.ne.s32.totalorder %s38, %s41
      %p47 = scmp.eq.s32.totalorder %s14, 0
      %p48 = por %p46, %p47
      %p49 = scmp.ne.s32.totalorder %s38, %s41
      %p50 = scmp.eq.s32.totalorder %s19, 3
      %p51 = por %p49, %p50
      %p52 = scmp.ne.s32.totalorder %s41, %s42
      %p53 = scmp.eq.s32.totalorder %s19, 0
      %p54 = por %p52, %p53
      %p55 = scmp.ne.s32.totalorder %s41, %s42
      %p56 = scmp.eq.s32.totalorder %s20, 3
      %p57 = por %p55, %p56
      %p59 = scmp.ne.s32.totalorder %s42, %s58
      %p60 = scmp.eq.s32.totalorder %s20, 0
      %p61 = por %p59, %p60
      %s63 = sadd.s32 %s62, 1
      %p66 = scmp.eq.s32.totalorder %s14, 3
      %p67 = scmp.ne.s32.totalorder %s62, %s64
      %p68 = scmp.eq.s32.totalorder %s14, 0
      %p69 = por %p67, %p68
      %p70 = scmp.ne.s32.totalorder %s62, %s64
      %p71 = scmp.eq.s32.totalorder %s19, 3
      %p72 = por %p70, %p71
      %p73 = scmp.ne.s32.totalorder %s64, %s65
      %p74 = scmp.eq.s32.totalorder %s19, 0
      %p75 = por %p73, %p74
      %p76 = scmp.ne.s32.totalorder %s64, %s65
      %p77 = scmp.eq.s32.totalorder %s20, 3
      %p78 = por %p76, %p77
      %p80 = scmp.ne.s32.totalorder %s65, %s79
      %p81 = scmp.eq.s32.totalorder %s20, 0
      %p82 = por %p80, %p81
      %s83 = ssub.s32 %s21, %s33
      %s84 = ssub.s32 %s22, %s29
      %s85 = sor.u32 %s83, %s84
      %p86 = scmp.eq.s32.totalorder %s85, 0
      %s88 = sadd.s32 %s87, 1
      %s89 = scalar_select %p86, %s87, %s88
      %p92 = pneg %p86
      %p93 = scmp.eq.s32.totalorder %s14, 3
      %p94 = por %p92, %p93
      %p95 = scmp.ne.s32.totalorder %s87, %s90
      %p96 = scmp.eq.s32.totalorder %s14, 0
      %p97 = por %p95, %p96
      %p98 = scmp.ne.s32.totalorder %s87, %s90
      %p99 = scmp.eq.s32.totalorder %s19, 3
      %p100 = por %p98, %p99
      %p101 = scmp.ne.s32.totalorder %s90, %s91
      %p102 = scmp.eq.s32.totalorder %s19, 0
      %p103 = por %p101, %p102
      %p104 = scmp.ne.s32.totalorder %s90, %s91
      %p105 = scmp.eq.s32.totalorder %s20, 3
      %p106 = por %p104, %p105
      %p108 = scmp.ne.s32.totalorder %s91, %s107
      %p109 = scmp.eq.s32.totalorder %s20, 0
      %p110 = por %p108, %p109
      %s111 = ssub.s32 %s21, %s33
      %s112 = ssub.s32 %s22, %s29
      %s113 = sor.u32 %s111, %s112
      %p114 = scmp.eq.s32.totalorder %s113, 0
      %s116 = sadd.s32 %s115, 1
      %s117 = scalar_select %p114, %s115, %s116
      %p120 = pneg %p114
      %p121 = scmp.eq.s32.totalorder %s14, 3
      %p122 = por %p120, %p121
      %p123 = scmp.ne.s32.totalorder %s115, %s118
      %p124 = scmp.eq.s32.totalorder %s14, 0
      %p125 = por %p123, %p124
      %p126 = scmp.ne.s32.totalorder %s115, %s118
      %p127 = scmp.eq.s32.totalorder %s19, 3
      %p128 = por %p126, %p127
      %p129 = scmp.ne.s32.totalorder %s118, %s119
      %p130 = scmp.eq.s32.totalorder %s19, 0
      %p131 = por %p129, %p130
      %p132 = scmp.ne.s32.totalorder %s118, %s119
      %p133 = scmp.eq.s32.totalorder %s20, 3
      %p134 = por %p132, %p133
      %p136 = scmp.ne.s32.totalorder %s119, %s135
      %p137 = scmp.eq.s32.totalorder %s20, 0
      %p138 = por %p136, %p137
      %s139 = ssub.s32 %s21, %s33
      %s140 = ssub.s32 %s22, %s29
      %s141 = sor.u32 %s139, %s140
      %p142 = scmp.eq.s32.totalorder %s141, 0
      %s144 = sadd.s32 %s143, 1
      %s145 = scalar_select %p142, %s143, %s144
      %p148 = pneg %p142
      %p149 = scmp.eq.s32.totalorder %s14, 3
      %p150 = por %p148, %p149
      %p151 = scmp.ne.s32.totalorder %s143, %s146
      %p152 = scmp.eq.s32.totalorder %s14, 0
      %p153 = por %p151, %p152
      %p154 = scmp.ne.s32.totalorder %s143, %s146
      %p155 = scmp.eq.s32.totalorder %s19, 3
      %p156 = por %p154, %p155
      %p157 = scmp.ne.s32.totalorder %s146, %s147
      %p158 = scmp.eq.s32.totalorder %s19, 0
      %p159 = por %p157, %p158
      %p160 = scmp.ne.s32.totalorder %s146, %s147
      %p161 = scmp.eq.s32.totalorder %s20, 3
      %p162 = por %p160, %p161
      %p164 = scmp.ne.s32.totalorder %s147, %s163
      %p165 = scmp.eq.s32.totalorder %s20, 0
      %p166 = por %p164, %p165
      %p167 = scmp.le.s32.totalorder 1, %s14
      %p168 = scmp.lt.s32.totalorder %s14, 5
      %p169 = pnand %p167, %p168
      %p170 = pneg %p169
      // Predicated region
      $region9: #{tpu_custom_call.1} parent=5 // pred_check
        _
      $region10: #{tpu_custom_call.1} parent=5 // pred_check_branch
        %172 = sbr.rel (%p169) target = $region12
      $region11: #{tpu_custom_call.1} parent=5 // pred_region
        %s173 = ssub.s32 %s14, 1
        // Predicated region
        $region13: #{tpu_custom_call.1} parent=11 // pred_check
          %p174 = pneg %p75
        $region14: #{tpu_custom_call.1} parent=11 // pred_check_branch
          %176 = sbr.rel (%p174) target = $region16
        $region15: #{tpu_custom_call.1} parent=11 // pred_region
          _
        $region16: #{tpu_custom_call.1} parent=11 // pred_fallthru
          _
      $region12: #{tpu_custom_call.1} parent=5 // pred_fallthru
        _
      %p177 = scmp.lt.s32.totalorder %s14, 4
      // Predicated region
      $region17: #{tpu_custom_call.1} parent=5 // pred_check
        %p178 = pneg %p177
      $region18: #{tpu_custom_call.1} parent=5 // pred_check_branch
        %180 = sbr.rel (%p178) target = $region20
      $region19: #{tpu_custom_call.1} parent=5 // pred_region
        // Predicated region
        $region21: #{tpu_custom_call.1} parent=19 // pred_check
          %p181 = pneg %p48
        $region22: #{tpu_custom_call.1} parent=19 // pred_check_branch
          %183 = sbr.rel (%p181) target = $region24
        $region23: #{tpu_custom_call.1} parent=19 // pred_region
          %s184 = sand.u32 %s38, 1
          %s185 = scalar_lea.sflag [#allocation3], %s184
          %s186 = sand.u32 %s38, 1
          %s187 = smul.addr %s186, 384
          %s188 = scalar_lea.vmem [#allocation2], %s187
          %s189 = smul.u32 16, %s22
          %191 = vsyncadd %s185, 0
          %s192 = smul.addr %s189, 3
          %s193 = smul.addr %s21, 96
          %s194 = sadd.s32 %s192, %s193
          %s195 = smul.addr %s194, 8
          %s196 = scalar_lea.hbm %s0, %s195
          %s197 = sshll.u32 %s196, 4
          %s198 = int_to_ptr.hbm [resolvable:$true] %s197
          %s199 = sshll.u32 %s188, 4
          %s200 = int_to_ptr.vmem [resolvable:$true] %s199
          %205 = dma.hbm_to_vmem [thread:$0]  %s198, 6144, %s200, %s185, 384, 384, 24
        $region24: #{tpu_custom_call.1} parent=19 // pred_fallthru
          _
      $region20: #{tpu_custom_call.1} parent=5 // pred_fallthru
        _
      %p206 = scmp.le.s32.totalorder 1, %s14
      %p207 = scmp.lt.s32.totalorder %s14, 5
      %p208 = pnand %p206, %p207
      %p209 = pneg %p208
      // Predicated region
      $region25: #{tpu_custom_call.1} parent=5 // pred_check
        _
      $region26: #{tpu_custom_call.1} parent=5 // pred_check_branch
        %211 = sbr.rel (%p208) target = $region28
      $region27: #{tpu_custom_call.1} parent=5 // pred_region
        %s212 = ssub.s32 %s14, 1
        %s213 = sand.u32 %s41, 1
        %s214 = scalar_lea.sflag [#allocation3], %s213
        %s215 = sand.u32 %s41, 1
        %s216 = smul.addr %s215, 384
        %s217 = scalar_lea.vmem [#allocation2], %s216
        // Predicated region
        $region29: #{tpu_custom_call.1} parent=27 // pred_check
          %p218 = pneg %p54
        $region30: #{tpu_custom_call.1} parent=27 // pred_check_branch
          %220 = sbr.rel (%p218) target = $region32
        $region31: #{tpu_custom_call.1} parent=27 // pred_region
          %222 = dma.done %s214, 6144
        $region32: #{tpu_custom_call.1} parent=27 // pred_fallthru
          _
        %s223 = sand.u32 %s41, 1
        %s224 = scalar_lea.sflag [#allocation3], %s223
        %s225 = sand.u32 %s41, 1
        %s226 = smul.addr %s225, 384
        %s227 = scalar_lea.vmem [#allocation2], %s226
        %p228 = pneg %p54
        %p229 = pneg %p51
        %p230 = pneg %p75
        %p231 = pneg %p72
        %p232 = pneg %p103
        %p233 = pneg %p100
        %s234 = smul.u32 16, %s24
        %p235 = scmp.lt.s32.totalorder %s23, 1
        %s236 = scalar_select %p235, %s23, 1
        %p237 = scmp.lt.s32.totalorder %s234, 31
        %s238 = scalar_select %p237, %s234, 31
        %s239 = smul.addr %s236, 32
        %s240 = sadd.s32 %s238, %s239
        %s241 = smul.addr %s240, 8
        %s242 = scalar_lea.vmem %s2, %s241
        %p243 = pneg %p131
        %p244 = pneg %p128
        %s245 = smul.u32 16, %s24
        %p246 = scmp.lt.s32.totalorder %s23, 1
        %s247 = scalar_select %p246, %s23, 1
        %p248 = scmp.lt.s32.totalorder %s245, 31
        %s249 = scalar_select %p248, %s245, 31
        %s250 = smul.addr %s247, 32
        %s251 = sadd.s32 %s249, %s250
        %s252 = smul.addr %s251, 8
        %s253 = scalar_lea.vmem %s3, %s252
        %p254 = pneg %p159
        %p255 = pneg %p156
        %s256 = smul.u32 16, %s24
        %p257 = scmp.lt.s32.totalorder %s23, 1
        %s258 = scalar_select %p257, %s23, 1
        %p259 = scmp.lt.s32.totalorder %s256, 31
        %s260 = scalar_select %p259, %s256, 31
        %s261 = smul.addr %s258, 32
        %s262 = sadd.s32 %s260, %s261
        %s263 = smul.addr %s262, 8
        %s264 = scalar_lea.vmem %s4, %s263
        %s265 = smul.u32 16, %s24
        %s266 = smul.u32 16, %s24
        %p267 = scmp.lt.s32.totalorder %s23, 1
        %s268 = scalar_select %p267, %s23, 1
        %p269 = scmp.lt.s32.totalorder %s266, 31
        %s270 = scalar_select %p269, %s266, 31
        %s271 = smul.addr %s268, 32
        %s272 = sadd.s32 %s270, %s271
        %s273 = smul.addr %s272, 8
        %s274 = scalar_lea.vmem %s2, %s273
        %s275 = smul.u32 16, %s24
        %s276 = smul.u32 16, %s24
        %p277 = scmp.lt.s32.totalorder %s23, 1
        %s278 = scalar_select %p277, %s23, 1
        %p279 = scmp.lt.s32.totalorder %s276, 31
        %s280 = scalar_select %p279, %s276, 31
        %s281 = smul.addr %s278, 32
        %s282 = sadd.s32 %s280, %s281
        %s283 = smul.addr %s282, 8
        %s284 = scalar_lea.vmem %s3, %s283
        %s285 = smul.u32 16, %s24
        %s286 = smul.u32 16, %s24
        %p287 = scmp.lt.s32.totalorder %s23, 1
        %s288 = scalar_select %p287, %s23, 1
        %p289 = scmp.lt.s32.totalorder %s286, 31
        %s290 = scalar_select %p289, %s286, 31
        %s291 = smul.addr %s288, 32
        %s292 = sadd.s32 %s290, %s291
        %s293 = smul.addr %s292, 8
        %s294 = scalar_lea.vmem %s4, %s293
        %s295 = smul.u32 16, %s24
        %v296 = vld [vmem:[%s217] sm:$0xff]
        %v297 = vld [vmem:[%s217 + $0x8] sm:$0xff]
        %v298 = vld [vmem:[%s217 + $0x10] sm:$0xff]
        %v299 = vld [vmem:[%s217 + $0x18] sm:$0xff]
        %v300 = vld [vmem:[%s217 + $0x20] sm:$0xff]
        %v301 = vld [vmem:[%s217 + $0x28] sm:$0xff]
        %v302 = vld [vmem:[%s217 + $0x30] sm:$0xff]
        %v303 = vld [vmem:[%s217 + $0x38] sm:$0xff]
        %v304 = vld [vmem:[%s217 + $0x40] sm:$0xff]
        %v305 = vld [vmem:[%s217 + $0x48] sm:$0xff]
        %v306 = vld [vmem:[%s217 + $0x50] sm:$0xff]
        %v307 = vld [vmem:[%s217 + $0x58] sm:$0xff]
        %v308 = vld [vmem:[%s217 + $0x60] sm:$0xff]
        %v309 = vld [vmem:[%s217 + $0x68] sm:$0xff]
        %v310 = vld [vmem:[%s217 + $0x70] sm:$0xff]
        %v311 = vld [vmem:[%s217 + $0x78] sm:$0xff]
        %v312 = vld [vmem:[%s217 + $0x80] sm:$0xff]
        %v313 = vld [vmem:[%s217 + $0x88] sm:$0xff]
        %v314 = vld [vmem:[%s217 + $0x90] sm:$0xff]
        %v315 = vld [vmem:[%s217 + $0x98] sm:$0xff]
        %v316 = vld [vmem:[%s217 + $0xa0] sm:$0xff]
        %v317 = vld [vmem:[%s217 + $0xa8] sm:$0xff]
        %v318 = vld [vmem:[%s217 + $0xb0] sm:$0xff]
        %v319 = vld [vmem:[%s217 + $0xb8] sm:$0xff]
        %v320 = vld [vmem:[%s217 + $0xc0] sm:$0xff]
        %v321 = vld [vmem:[%s217 + $0xc8] sm:$0xff]
        %v322 = vld [vmem:[%s217 + $0xd0] sm:$0xff]
        %v323 = vld [vmem:[%s217 + $0xd8] sm:$0xff]
        %v324 = vld [vmem:[%s217 + $0xe0] sm:$0xff]
        %v325 = vld [vmem:[%s217 + $0xe8] sm:$0xff]
        %v326 = vld [vmem:[%s217 + $0xf0] sm:$0xff]
        %v327 = vld [vmem:[%s217 + $0xf8] sm:$0xff]
        %v328 = vld [vmem:[%s217 + $0x100] sm:$0xff]
        %v329 = vld [vmem:[%s217 + $0x108] sm:$0xff]
        %v330 = vld [vmem:[%s217 + $0x110] sm:$0xff]
        %v331 = vld [vmem:[%s217 + $0x118] sm:$0xff]
        %v332 = vld [vmem:[%s217 + $0x120] sm:$0xff]
        %v333 = vld [vmem:[%s217 + $0x128] sm:$0xff]
        %v334 = vld [vmem:[%s217 + $0x130] sm:$0xff]
        %v335 = vld [vmem:[%s217 + $0x138] sm:$0xff]
        %v336 = vld [vmem:[%s217 + $0x140] sm:$0xff]
        %v337 = vld [vmem:[%s217 + $0x148] sm:$0xff]
        %v338 = vld [vmem:[%s217 + $0x150] sm:$0xff]
        %v339 = vld [vmem:[%s217 + $0x158] sm:$0xff]
        %v340 = vld [vmem:[%s217 + $0x160] sm:$0xff]
        %v341 = vld [vmem:[%s217 + $0x168] sm:$0xff]
        %v342 = vld [vmem:[%s217 + $0x170] sm:$0xff]
        %v343 = vld [vmem:[%s217 + $0x178] sm:$0xff]
        %v344 = vld [vmem:[%s1] sm:$0xff]
        %v345 = vld [vmem:[%s1 + $0x8] sm:$0xff]
        %v346 = vld [vmem:[%s1 + $0x10] sm:$0xff]
        %v347 = vld [vmem:[%s1 + $0x18] sm:$0xff]
        %v348 = vld [vmem:[%s1 + $0x20] sm:$0xff]
        %v349 = vld [vmem:[%s1 + $0x28] sm:$0xff]
        %v350 = vld [vmem:[%s1 + $0x30] sm:$0xff]
        %v351 = vld [vmem:[%s1 + $0x38] sm:$0xff]
        %v352 = vld [vmem:[%s1 + $0x40] sm:$0xff]
        %v353 = vld [vmem:[%s1 + $0x48] sm:$0xff]
        %v354 = vld [vmem:[%s1 + $0x50] sm:$0xff]
        %v355 = vld [vmem:[%s1 + $0x58] sm:$0xff]
        %v356 = vld [vmem:[%s1 + $0x60] sm:$0xff]
        %v357 = vld [vmem:[%s1 + $0x68] sm:$0xff]
        %v358 = vld [vmem:[%s1 + $0x70] sm:$0xff]
        %v359 = vld [vmem:[%s1 + $0x78] sm:$0xff]
        %v360 = vld [vmem:[%s1 + $0x80] sm:$0xff]
        %v361 = vld [vmem:[%s1 + $0x88] sm:$0xff]
        %v362 = vld [vmem:[%s1 + $0x90] sm:$0xff]
        %v363 = vld [vmem:[%s1 + $0x98] sm:$0xff]
        %v364 = vld [vmem:[%s1 + $0xa0] sm:$0xff]
        %v365 = vld [vmem:[%s1 + $0xa8] sm:$0xff]
        %v366 = vld [vmem:[%s1 + $0xb0] sm:$0xff]
        %v367 = vld [vmem:[%s1 + $0xb8] sm:$0xff]
        %v368 = vld [vmem:[%s1 + $0xc0] sm:$0xff]
        %v369 = vld [vmem:[%s1 + $0xc8] sm:$0xff]
        %v370 = vld [vmem:[%s1 + $0xd0] sm:$0xff]
        %v371 = vld [vmem:[%s1 + $0xd8] sm:$0xff]
        %v372 = vld [vmem:[%s1 + $0xe0] sm:$0xff]
        %v373 = vld [vmem:[%s1 + $0xe8] sm:$0xff]
        %v374 = vld [vmem:[%s1 + $0xf0] sm:$0xff]
        %v375 = vld [vmem:[%s1 + $0xf8] sm:$0xff]
        %v376 = vld [vmem:[%s1 + $0x100] sm:$0xff]
        %v377 = vld [vmem:[%s1 + $0x108] sm:$0xff]
        %v378 = vld [vmem:[%s1 + $0x110] sm:$0xff]
        %v379 = vld [vmem:[%s1 + $0x118] sm:$0xff]
        %v380 = vld [vmem:[%s1 + $0x120] sm:$0xff]
        %v381 = vld [vmem:[%s1 + $0x128] sm:$0xff]
        %v382 = vld [vmem:[%s1 + $0x130] sm:$0xff]
        %v383 = vld [vmem:[%s1 + $0x138] sm:$0xff]
        %v384 = vld [vmem:[%s1 + $0x140] sm:$0xff]
        %v385 = vld [vmem:[%s1 + $0x148] sm:$0xff]
        %v386 = vld [vmem:[%s1 + $0x150] sm:$0xff]
        %v387 = vld [vmem:[%s1 + $0x158] sm:$0xff]
        %v388 = vld [vmem:[%s1 + $0x160] sm:$0xff]
        %v389 = vld [vmem:[%s1 + $0x168] sm:$0xff]
        %v390 = vld [vmem:[%s1 + $0x170] sm:$0xff]
        %v391 = vld [vmem:[%s1 + $0x178] sm:$0xff]
        %v392 = vld [vmem:[%s1 + $0x180] sm:$0xff]
        %v393 = vld [vmem:[%s1 + $0x188] sm:$0xff]
        %v394 = vld [vmem:[%s1 + $0x190] sm:$0xff]
        %v395 = vld [vmem:[%s1 + $0x198] sm:$0xff]
        %v396 = vld [vmem:[%s1 + $0x1a0] sm:$0xff]
        %v397 = vld [vmem:[%s1 + $0x1a8] sm:$0xff]
        %v398 = vld [vmem:[%s1 + $0x1b0] sm:$0xff]
        %v399 = vld [vmem:[%s1 + $0x1b8] sm:$0xff]
        %v400 = vld [vmem:[%s1 + $0x1c0] sm:$0xff]
        %v401 = vld [vmem:[%s1 + $0x1c8] sm:$0xff]
        %v402 = vld [vmem:[%s1 + $0x1d0] sm:$0xff]
        %v403 = vld [vmem:[%s1 + $0x1d8] sm:$0xff]
        %v404 = vld [vmem:[%s1 + $0x1e0] sm:$0xff]
        %v405 = vld [vmem:[%s1 + $0x1e8] sm:$0xff]
        %v406 = vld [vmem:[%s1 + $0x1f0] sm:$0xff]
        %v407 = vld [vmem:[%s1 + $0x1f8] sm:$0xff]
        %v408 = vld [vmem:[%s1 + $0x200] sm:$0xff]
        %v409 = vld [vmem:[%s1 + $0x208] sm:$0xff]
        %v410 = vld [vmem:[%s1 + $0x210] sm:$0xff]
        %v411 = vld [vmem:[%s1 + $0x218] sm:$0xff]
        %v412 = vld [vmem:[%s1 + $0x220] sm:$0xff]
        %v413 = vld [vmem:[%s1 + $0x228] sm:$0xff]
        %v414 = vld [vmem:[%s1 + $0x230] sm:$0xff]
        %v415 = vld [vmem:[%s1 + $0x238] sm:$0xff]
        %v416 = vld [vmem:[%s1 + $0x240] sm:$0xff]
        %v417 = vld [vmem:[%s1 + $0x248] sm:$0xff]
        %v418 = vld [vmem:[%s1 + $0x250] sm:$0xff]
        %v419 = vld [vmem:[%s1 + $0x258] sm:$0xff]
        %v420 = vld [vmem:[%s1 + $0x260] sm:$0xff]
        %v421 = vld [vmem:[%s1 + $0x268] sm:$0xff]
        %v422 = vld [vmem:[%s1 + $0x270] sm:$0xff]
        %v423 = vld [vmem:[%s1 + $0x278] sm:$0xff]
        %v424 = vld [vmem:[%s1 + $0x280] sm:$0xff]
        %v425 = vld [vmem:[%s1 + $0x288] sm:$0xff]
        %v426 = vld [vmem:[%s1 + $0x290] sm:$0xff]
        %v427 = vld [vmem:[%s1 + $0x298] sm:$0xff]
        %v428 = vld [vmem:[%s1 + $0x2a0] sm:$0xff]
        %v429 = vld [vmem:[%s1 + $0x2a8] sm:$0xff]
        %v430 = vld [vmem:[%s1 + $0x2b0] sm:$0xff]
        %v431 = vld [vmem:[%s1 + $0x2b8] sm:$0xff]
        %v432 = vld [vmem:[%s1 + $0x2c0] sm:$0xff]
        %v433 = vld [vmem:[%s1 + $0x2c8] sm:$0xff]
        %v434 = vld [vmem:[%s1 + $0x2d0] sm:$0xff]
        %v435 = vld [vmem:[%s1 + $0x2d8] sm:$0xff]
        %v436 = vld [vmem:[%s1 + $0x2e0] sm:$0xff]
        %v437 = vld [vmem:[%s1 + $0x2e8] sm:$0xff]
        %v438 = vld [vmem:[%s1 + $0x2f0] sm:$0xff]
        %v439 = vld [vmem:[%s1 + $0x2f8] sm:$0xff]
        %440 = vmatpush.msra.mxu0 %v374
        %441 = vmatpush.msra.mxu0 %v372
        %442 = vmatpush.msra.mxu0 %v370
        %443 = vmatpush.msra.mxu0 %v368
        %444 = vmatpush.msra.mxu0 %v366
        %445 = vmatpush.msra.mxu0 %v364
        %446 = vmatpush.msra.mxu0 %v362
        %447 = vmatpush.msra.mxu0 %v360
        %448 = vmatpush.msra.mxu0 %v358
        %449 = vmatpush.msra.mxu0 %v356
        %450 = vmatpush.msra.mxu0 %v354
        %451 = vmatpush.msra.mxu0 %v352
        %452 = vmatpush.msra.mxu0 %v350
        %453 = vmatpush.msra.mxu0 %v348
        %454 = vmatpush.msra.mxu0 %v346
        %455 = vmatpush.msra.mxu0 %v344
        %456 = vmatmul.f32.gmra.mxu0 %v296
        %v457 = vpop.f32.mrf.mxu0
        %v458 = vadd.f32 0.0, %v457
        %459 = vmatmul.f32.gmra.mxu0 %v299
        %v460 = vpop.f32.mrf.mxu0
        %v461 = vadd.f32 0.0, %v460
        %462 = vmatmul.f32.gmra.mxu0 %v302
        %v463 = vpop.f32.mrf.mxu0
        %v464 = vadd.f32 0.0, %v463
        %465 = vmatmul.f32.gmra.mxu0 %v305
        %v466 = vpop.f32.mrf.mxu0
        %v467 = vadd.f32 0.0, %v466
        %468 = vmatmul.f32.gmra.mxu0 %v308
        %v469 = vpop.f32.mrf.mxu0
        %v470 = vadd.f32 0.0, %v469
        %471 = vmatmul.f32.gmra.mxu0 %v311
        %v472 = vpop.f32.mrf.mxu0
        %v473 = vadd.f32 0.0, %v472
        %474 = vmatmul.f32.gmra.mxu0 %v314
        %v475 = vpop.f32.mrf.mxu0
        %v476 = vadd.f32 0.0, %v475
        %477 = vmatmul.f32.gmra.mxu0 %v317
        %v478 = vpop.f32.mrf.mxu0
        %v479 = vadd.f32 0.0, %v478
        %480 = vmatmul.f32.gmra.mxu0 %v320
        %v481 = vpop.f32.mrf.mxu0
        %v482 = vadd.f32 0.0, %v481
        %483 = vmatmul.f32.gmra.mxu0 %v323
        %v484 = vpop.f32.mrf.mxu0
        %v485 = vadd.f32 0.0, %v484
        %486 = vmatmul.f32.gmra.mxu0 %v326
        %v487 = vpop.f32.mrf.mxu0
        %v488 = vadd.f32 0.0, %v487
        %489 = vmatmul.f32.gmra.mxu0 %v329
        %v490 = vpop.f32.mrf.mxu0
        %v491 = vadd.f32 0.0, %v490
        %492 = vmatmul.f32.gmra.mxu0 %v332
        %v493 = vpop.f32.mrf.mxu0
        %v494 = vadd.f32 0.0, %v493
        %495 = vmatmul.f32.gmra.mxu0 %v335
        %v496 = vpop.f32.mrf.mxu0
        %v497 = vadd.f32 0.0, %v496
        %498 = vmatmul.f32.gmra.mxu0 %v338
        %v499 = vpop.f32.mrf.mxu0
        %v500 = vadd.f32 0.0, %v499
        %501 = vmatmul.f32.gmra.mxu0 %v341
        %v502 = vpop.f32.mrf.mxu0
        %v503 = vadd.f32 0.0, %v502
        %504 = vdwg.mxu0
        %505 = vmatpush.msra.mxu0 %v406
        %506 = vmatpush.msra.mxu0 %v404
        %507 = vmatpush.msra.mxu0 %v402
        %508 = vmatpush.msra.mxu0 %v400
        %509 = vmatpush.msra.mxu0 %v398
        %510 = vmatpush.msra.mxu0 %v396
        %511 = vmatpush.msra.mxu0 %v394
        %512 = vmatpush.msra.mxu0 %v392
        %513 = vmatpush.msra.mxu0 %v390
        %514 = vmatpush.msra.mxu0 %v388
        %515 = vmatpush.msra.mxu0 %v386
        %516 = vmatpush.msra.mxu0 %v384
        %517 = vmatpush.msra.mxu0 %v382
        %518 = vmatpush.msra.mxu0 %v380
        %519 = vmatpush.msra.mxu0 %v378
        %520 = vmatpush.msra.mxu0 %v376
        %521 = vmatmul.f32.gmra.mxu0 %v297
        %v522 = vpop.f32.mrf.mxu0
        %v523 = vadd.f32 %v458, %v522
        %524 = vmatmul.f32.gmra.mxu0 %v300
        %v525 = vpop.f32.mrf.mxu0
        %v526 = vadd.f32 %v461, %v525
        %527 = vmatmul.f32.gmra.mxu0 %v303
        %v528 = vpop.f32.mrf.mxu0
        %v529 = vadd.f32 %v464, %v528
        %530 = vmatmul.f32.gmra.mxu0 %v306
        %v531 = vpop.f32.mrf.mxu0
        %v532 = vadd.f32 %v467, %v531
        %533 = vmatmul.f32.gmra.mxu0 %v309
        %v534 = vpop.f32.mrf.mxu0
        %v535 = vadd.f32 %v470, %v534
        %536 = vmatmul.f32.gmra.mxu0 %v312
        %v537 = vpop.f32.mrf.mxu0
        %v538 = vadd.f32 %v473, %v537
        %539 = vmatmul.f32.gmra.mxu0 %v315
        %v540 = vpop.f32.mrf.mxu0
        %v541 = vadd.f32 %v476, %v540
        %542 = vmatmul.f32.gmra.mxu0 %v318
        %v543 = vpop.f32.mrf.mxu0
        %v544 = vadd.f32 %v479, %v543
        %545 = vmatmul.f32.gmra.mxu0 %v321
        %v546 = vpop.f32.mrf.mxu0
        %v547 = vadd.f32 %v482, %v546
        %548 = vmatmul.f32.gmra.mxu0 %v324
        %v549 = vpop.f32.mrf.mxu0
        %v550 = vadd.f32 %v485, %v549
        %551 = vmatmul.f32.gmra.mxu0 %v327
        %v552 = vpop.f32.mrf.mxu0
        %v553 = vadd.f32 %v488, %v552
        %554 = vmatmul.f32.gmra.mxu0 %v330
        %v555 = vpop.f32.mrf.mxu0
        %v556 = vadd.f32 %v491, %v555
        %557 = vmatmul.f32.gmra.mxu0 %v333
        %v558 = vpop.f32.mrf.mxu0
        %v559 = vadd.f32 %v494, %v558
        %560 = vmatmul.f32.gmra.mxu0 %v336
        %v561 = vpop.f32.mrf.mxu0
        %v562 = vadd.f32 %v497, %v561
        %563 = vmatmul.f32.gmra.mxu0 %v339
        %v564 = vpop.f32.mrf.mxu0
        %v565 = vadd.f32 %v500, %v564
        %566 = vmatmul.f32.gmra.mxu0 %v342
        %v567 = vpop.f32.mrf.mxu0
        %v568 = vadd.f32 %v503, %v567
        %569 = vdwg.mxu0
        %570 = vmatpush.msra.mxu0 %v438
        %571 = vmatpush.msra.mxu0 %v436
        %572 = vmatpush.msra.mxu0 %v434
        %573 = vmatpush.msra.mxu0 %v432
        %574 = vmatpush.msra.mxu0 %v430
        %575 = vmatpush.msra.mxu0 %v428
        %576 = vmatpush.msra.mxu0 %v426
        %577 = vmatpush.msra.mxu0 %v424
        %578 = vmatpush.msra.mxu0 %v422
        %579 = vmatpush.msra.mxu0 %v420
        %580 = vmatpush.msra.mxu0 %v418
        %581 = vmatpush.msra.mxu0 %v416
        %582 = vmatpush.msra.mxu0 %v414
        %583 = vmatpush.msra.mxu0 %v412
        %584 = vmatpush.msra.mxu0 %v410
        %585 = vmatpush.msra.mxu0 %v408
        %586 = vmatmul.f32.gmra.mxu0 %v298
        %v587 = vpop.f32.mrf.mxu0
        %v588 = vadd.f32 %v523, %v587
        %589 = vmatmul.f32.gmra.mxu0 %v301
        %v590 = vpop.f32.mrf.mxu0
        %v591 = vadd.f32 %v526, %v590
        %592 = vmatmul.f32.gmra.mxu0 %v304
        %v593 = vpop.f32.mrf.mxu0
        %v594 = vadd.f32 %v529, %v593
        %595 = vmatmul.f32.gmra.mxu0 %v307
        %v596 = vpop.f32.mrf.mxu0
        %v597 = vadd.f32 %v532, %v596
        %598 = vmatmul.f32.gmra.mxu0 %v310
        %v599 = vpop.f32.mrf.mxu0
        %v600 = vadd.f32 %v535, %v599
        %601 = vmatmul.f32.gmra.mxu0 %v313
        %v602 = vpop.f32.mrf.mxu0
        %v603 = vadd.f32 %v538, %v602
        %604 = vmatmul.f32.gmra.mxu0 %v316
        %v605 = vpop.f32.mrf.mxu0
        %v606 = vadd.f32 %v541, %v605
        %607 = vmatmul.f32.gmra.mxu0 %v319
        %v608 = vpop.f32.mrf.mxu0
        %v609 = vadd.f32 %v544, %v608
        %610 = vmatmul.f32.gmra.mxu0 %v322
        %v611 = vpop.f32.mrf.mxu0
        %v612 = vadd.f32 %v547, %v611
        %613 = vmatmul.f32.gmra.mxu0 %v325
        %v614 = vpop.f32.mrf.mxu0
        %v615 = vadd.f32 %v550, %v614
        %616 = vmatmul.f32.gmra.mxu0 %v328
        %v617 = vpop.f32.mrf.mxu0
        %v618 = vadd.f32 %v553, %v617
        %619 = vmatmul.f32.gmra.mxu0 %v331
        %v620 = vpop.f32.mrf.mxu0
        %v621 = vadd.f32 %v556, %v620
        %622 = vmatmul.f32.gmra.mxu0 %v334
        %v623 = vpop.f32.mrf.mxu0
        %v624 = vadd.f32 %v559, %v623
        %625 = vmatmul.f32.gmra.mxu0 %v337
        %v626 = vpop.f32.mrf.mxu0
        %v627 = vadd.f32 %v562, %v626
        %628 = vmatmul.f32.gmra.mxu0 %v340
        %v629 = vpop.f32.mrf.mxu0
        %v630 = vadd.f32 %v565, %v629
        %631 = vmatmul.f32.gmra.mxu0 %v343
        %v632 = vpop.f32.mrf.mxu0
        %v633 = vadd.f32 %v568, %v632
        %634 = vdwg.mxu0
        %635 = vmatpush.msra.mxu0 %v375
        %636 = vmatpush.msra.mxu0 %v373
        %637 = vmatpush.msra.mxu0 %v371
        %638 = vmatpush.msra.mxu0 %v369
        %639 = vmatpush.msra.mxu0 %v367
        %640 = vmatpush.msra.mxu0 %v365
        %641 = vmatpush.msra.mxu0 %v363
        %642 = vmatpush.msra.mxu0 %v361
        %643 = vmatpush.msra.mxu0 %v359
        %644 = vmatpush.msra.mxu0 %v357
        %645 = vmatpush.msra.mxu0 %v355
        %646 = vmatpush.msra.mxu0 %v353
        %647 = vmatpush.msra.mxu0 %v351
        %648 = vmatpush.msra.mxu0 %v349
        %649 = vmatpush.msra.mxu0 %v347
        %650 = vmatpush.msra.mxu0 %v345
        %651 = vmatmul.f32.gmra.mxu0 %v296
        %v652 = vpop.f32.mrf.mxu0
        %v653 = vadd.f32 0.0, %v652
        %654 = vmatmul.f32.gmra.mxu0 %v299
        %v655 = vpop.f32.mrf.mxu0
        %v656 = vadd.f32 0.0, %v655
        %657 = vmatmul.f32.gmra.mxu0 %v302
        %v658 = vpop.f32.mrf.mxu0
        %v659 = vadd.f32 0.0, %v658
        %660 = vmatmul.f32.gmra.mxu0 %v305
        %v661 = vpop.f32.mrf.mxu0
        %v662 = vadd.f32 0.0, %v661
        %663 = vmatmul.f32.gmra.mxu0 %v308
        %v664 = vpop.f32.mrf.mxu0
        %v665 = vadd.f32 0.0, %v664
        %666 = vmatmul.f32.gmra.mxu0 %v311
        %v667 = vpop.f32.mrf.mxu0
        %v668 = vadd.f32 0.0, %v667
        %669 = vmatmul.f32.gmra.mxu0 %v314
        %v670 = vpop.f32.mrf.mxu0
        %v671 = vadd.f32 0.0, %v670
        %672 = vmatmul.f32.gmra.mxu0 %v317
        %v673 = vpop.f32.mrf.mxu0
        %v674 = vadd.f32 0.0, %v673
        %675 = vmatmul.f32.gmra.mxu0 %v320
        %v676 = vpop.f32.mrf.mxu0
        %v677 = vadd.f32 0.0, %v676
        %678 = vmatmul.f32.gmra.mxu0 %v323
        %v679 = vpop.f32.mrf.mxu0
        %v680 = vadd.f32 0.0, %v679
        %681 = vmatmul.f32.gmra.mxu0 %v326
        %v682 = vpop.f32.mrf.mxu0
        %v683 = vadd.f32 0.0, %v682
        %684 = vmatmul.f32.gmra.mxu0 %v329
        %v685 = vpop.f32.mrf.mxu0
        %v686 = vadd.f32 0.0, %v685
        %687 = vmatmul.f32.gmra.mxu0 %v332
        %v688 = vpop.f32.mrf.mxu0
        %v689 = vadd.f32 0.0, %v688
        %690 = vmatmul.f32.gmra.mxu0 %v335
        %v691 = vpop.f32.mrf.mxu0
        %v692 = vadd.f32 0.0, %v691
        %693 = vmatmul.f32.gmra.mxu0 %v338
        %v694 = vpop.f32.mrf.mxu0
        %v695 = vadd.f32 0.0, %v694
        %696 = vmatmul.f32.gmra.mxu0 %v341
        %v697 = vpop.f32.mrf.mxu0
        %v698 = vadd.f32 0.0, %v697
        %699 = vdwg.mxu0
        %700 = vmatpush.msra.mxu0 %v407
        %701 = vmatpush.msra.mxu0 %v405
        %702 = vmatpush.msra.mxu0 %v403
        %703 = vmatpush.msra.mxu0 %v401
        %704 = vmatpush.msra.mxu0 %v399
        %705 = vmatpush.msra.mxu0 %v397
        %706 = vmatpush.msra.mxu0 %v395
        %707 = vmatpush.msra.mxu0 %v393
        %708 = vmatpush.msra.mxu0 %v391
        %709 = vmatpush.msra.mxu0 %v389
        %710 = vmatpush.msra.mxu0 %v387
        %711 = vmatpush.msra.mxu0 %v385
        %712 = vmatpush.msra.mxu0 %v383
        %713 = vmatpush.msra.mxu0 %v381
        %714 = vmatpush.msra.mxu0 %v379
        %715 = vmatpush.msra.mxu0 %v377
        %716 = vmatmul.f32.gmra.mxu0 %v297
        %v717 = vpop.f32.mrf.mxu0
        %v718 = vadd.f32 %v653, %v717
        %719 = vmatmul.f32.gmra.mxu0 %v300
        %v720 = vpop.f32.mrf.mxu0
        %v721 = vadd.f32 %v656, %v720
        %722 = vmatmul.f32.gmra.mxu0 %v303
        %v723 = vpop.f32.mrf.mxu0
        %v724 = vadd.f32 %v659, %v723
        %725 = vmatmul.f32.gmra.mxu0 %v306
        %v726 = vpop.f32.mrf.mxu0
        %v727 = vadd.f32 %v662, %v726
        %728 = vmatmul.f32.gmra.mxu0 %v309
        %v729 = vpop.f32.mrf.mxu0
        %v730 = vadd.f32 %v665, %v729
        %731 = vmatmul.f32.gmra.mxu0 %v312
        %v732 = vpop.f32.mrf.mxu0
        %v733 = vadd.f32 %v668, %v732
        %734 = vmatmul.f32.gmra.mxu0 %v315
        %v735 = vpop.f32.mrf.mxu0
        %v736 = vadd.f32 %v671, %v735
        %737 = vmatmul.f32.gmra.mxu0 %v318
        %v738 = vpop.f32.mrf.mxu0
        %v739 = vadd.f32 %v674, %v738
        %740 = vmatmul.f32.gmra.mxu0 %v321
        %v741 = vpop.f32.mrf.mxu0
        %v742 = vadd.f32 %v677, %v741
        %743 = vmatmul.f32.gmra.mxu0 %v324
        %v744 = vpop.f32.mrf.mxu0
        %v745 = vadd.f32 %v680, %v744
        %746 = vmatmul.f32.gmra.mxu0 %v327
        %v747 = vpop.f32.mrf.mxu0
        %v748 = vadd.f32 %v683, %v747
        %749 = vmatmul.f32.gmra.mxu0 %v330
        %v750 = vpop.f32.mrf.mxu0
        %v751 = vadd.f32 %v686, %v750
        %752 = vmatmul.f32.gmra.mxu0 %v333
        %v753 = vpop.f32.mrf.mxu0
        %v754 = vadd.f32 %v689, %v753
        %755 = vmatmul.f32.gmra.mxu0 %v336
        %v756 = vpop.f32.mrf.mxu0
        %v757 = vadd.f32 %v692, %v756
        %758 = vmatmul.f32.gmra.mxu0 %v339
        %v759 = vpop.f32.mrf.mxu0
        %v760 = vadd.f32 %v695, %v759
        %761 = vmatmul.f32.gmra.mxu0 %v342
        %v762 = vpop.f32.mrf.mxu0
        %v763 = vadd.f32 %v698, %v762
        %764 = vdwg.mxu0
        %765 = vmatpush.msra.mxu0 %v439
        %766 = vmatpush.msra.mxu0 %v437
        %767 = vmatpush.msra.mxu0 %v435
        %768 = vmatpush.msra.mxu0 %v433
        %769 = vmatpush.msra.mxu0 %v431
        %770 = vmatpush.msra.mxu0 %v429
        %771 = vmatpush.msra.mxu0 %v427
        %772 = vmatpush.msra.mxu0 %v425
        %773 = vmatpush.msra.mxu0 %v423
        %774 = vmatpush.msra.mxu0 %v421
        %775 = vmatpush.msra.mxu0 %v419
        %776 = vmatpush.msra.mxu0 %v417
        %777 = vmatpush.msra.mxu0 %v415
        %778 = vmatpush.msra.mxu0 %v413
        %779 = vmatpush.msra.mxu0 %v411
        %780 = vmatpush.msra.mxu0 %v409
        %781 = vmatmul.f32.gmra.mxu0 %v298
        %v782 = vpop.f32.mrf.mxu0
        %v783 = vadd.f32 %v718, %v782
        %784 = vmatmul.f32.gmra.mxu0 %v301
        %v785 = vpop.f32.mrf.mxu0
        %v786 = vadd.f32 %v721, %v785
        %787 = vmatmul.f32.gmra.mxu0 %v304
        %v788 = vpop.f32.mrf.mxu0
        %v789 = vadd.f32 %v724, %v788
        %790 = vmatmul.f32.gmra.mxu0 %v307
        %v791 = vpop.f32.mrf.mxu0
        %v792 = vadd.f32 %v727, %v791
        %793 = vmatmul.f32.gmra.mxu0 %v310
        %v794 = vpop.f32.mrf.mxu0
        %v795 = vadd.f32 %v730, %v794
        %796 = vmatmul.f32.gmra.mxu0 %v313
        %v797 = vpop.f32.mrf.mxu0
        %v798 = vadd.f32 %v733, %v797
        %799 = vmatmul.f32.gmra.mxu0 %v316
        %v800 = vpop.f32.mrf.mxu0
        %v801 = vadd.f32 %v736, %v800
        %802 = vmatmul.f32.gmra.mxu0 %v319
        %v803 = vpop.f32.mrf.mxu0
        %v804 = vadd.f32 %v739, %v803
        %805 = vmatmul.f32.gmra.mxu0 %v322
        %v806 = vpop.f32.mrf.mxu0
        %v807 = vadd.f32 %v742, %v806
        %808 = vmatmul.f32.gmra.mxu0 %v325
        %v809 = vpop.f32.mrf.mxu0
        %v810 = vadd.f32 %v745, %v809
        %811 = vmatmul.f32.gmra.mxu0 %v328
        %v812 = vpop.f32.mrf.mxu0
        %v813 = vadd.f32 %v748, %v812
        %814 = vmatmul.f32.gmra.mxu0 %v331
        %v815 = vpop.f32.mrf.mxu0
        %v816 = vadd.f32 %v751, %v815
        %817 = vmatmul.f32.gmra.mxu0 %v334
        %v818 = vpop.f32.mrf.mxu0
        %v819 = vadd.f32 %v754, %v818
        %820 = vmatmul.f32.gmra.mxu0 %v337
        %v821 = vpop.f32.mrf.mxu0
        %v822 = vadd.f32 %v757, %v821
        %823 = vmatmul.f32.gmra.mxu0 %v340
        %v824 = vpop.f32.mrf.mxu0
        %v825 = vadd.f32 %v760, %v824
        %826 = vmatmul.f32.gmra.mxu0 %v343
        %v827 = vpop.f32.mrf.mxu0
        %v828 = vadd.f32 %v763, %v827
        %829 = vdwg.mxu0
        %vm830 = vcmask 523264
        %831 = vst.msk [vmem:[%s274] sm:$0xff] %vm830, %v588
        %832 = vst.msk [vmem:[%s274 + $0x8] sm:$0xff] %vm830, %v591
        %833 = vst.msk [vmem:[%s274 + $0x10] sm:$0xff] %vm830, %v594
        %834 = vst.msk [vmem:[%s274 + $0x18] sm:$0xff] %vm830, %v597
        %835 = vst.msk [vmem:[%s274 + $0x20] sm:$0xff] %vm830, %v600
        %836 = vst.msk [vmem:[%s274 + $0x28] sm:$0xff] %vm830, %v603
        %837 = vst.msk [vmem:[%s274 + $0x30] sm:$0xff] %vm830, %v606
        %838 = vst.msk [vmem:[%s274 + $0x38] sm:$0xff] %vm830, %v609
        %839 = vst.msk [vmem:[%s274 + $0x40] sm:$0xff] %vm830, %v612
        %840 = vst.msk [vmem:[%s274 + $0x48] sm:$0xff] %vm830, %v615
        %841 = vst.msk [vmem:[%s274 + $0x50] sm:$0xff] %vm830, %v618
        %842 = vst.msk [vmem:[%s274 + $0x58] sm:$0xff] %vm830, %v621
        %843 = vst.msk [vmem:[%s274 + $0x60] sm:$0xff] %vm830, %v624
        %844 = vst.msk [vmem:[%s274 + $0x68] sm:$0xff] %vm830, %v627
        %845 = vst.msk [vmem:[%s274 + $0x70] sm:$0xff] %vm830, %v630
        %846 = vst.msk [vmem:[%s274 + $0x78] sm:$0xff] %vm830, %v633
        %863 = vrot.lane.b32.xlu0 %v588, 64
        %v864 = vpop.permute.xlu0 %863
        %865 = vrot.lane.b32.xlu0 %v591, 64
        %v866 = vpop.permute.xlu0 %865
        %867 = vrot.lane.b32.xlu0 %v594, 64
        %v868 = vpop.permute.xlu0 %867
        %869 = vrot.lane.b32.xlu0 %v597, 64
        %v870 = vpop.permute.xlu0 %869
        %871 = vrot.lane.b32.xlu0 %v600, 64
        %v872 = vpop.permute.xlu0 %871
        %873 = vrot.lane.b32.xlu0 %v603, 64
        %v874 = vpop.permute.xlu0 %873
        %875 = vrot.lane.b32.xlu0 %v606, 64
        %v876 = vpop.permute.xlu0 %875
        %877 = vrot.lane.b32.xlu0 %v609, 64
        %v878 = vpop.permute.xlu0 %877
        %879 = vrot.lane.b32.xlu0 %v612, 64
        %v880 = vpop.permute.xlu0 %879
        %881 = vrot.lane.b32.xlu0 %v615, 64
        %v882 = vpop.permute.xlu0 %881
        %883 = vrot.lane.b32.xlu0 %v618, 64
        %v884 = vpop.permute.xlu0 %883
        %885 = vrot.lane.b32.xlu0 %v621, 64
        %v886 = vpop.permute.xlu0 %885
        %887 = vrot.lane.b32.xlu0 %v624, 64
        %v888 = vpop.permute.xlu0 %887
        %889 = vrot.lane.b32.xlu0 %v627, 64
        %v890 = vpop.permute.xlu0 %889
        %891 = vrot.lane.b32.xlu0 %v630, 64
        %v892 = vpop.permute.xlu0 %891
        %893 = vrot.lane.b32.xlu0 %v633, 64
        %v894 = vpop.permute.xlu0 %893
        %911 = vst.msk [vmem:[%s284] sm:$0xff] %vm830, %v864
        %912 = vst.msk [vmem:[%s284 + $0x8] sm:$0xff] %vm830, %v866
        %913 = vst.msk [vmem:[%s284 + $0x10] sm:$0xff] %vm830, %v868
        %914 = vst.msk [vmem:[%s284 + $0x18] sm:$0xff] %vm830, %v870
        %915 = vst.msk [vmem:[%s284 + $0x20] sm:$0xff] %vm830, %v872
        %916 = vst.msk [vmem:[%s284 + $0x28] sm:$0xff] %vm830, %v874
        %917 = vst.msk [vmem:[%s284 + $0x30] sm:$0xff] %vm830, %v876
        %918 = vst.msk [vmem:[%s284 + $0x38] sm:$0xff] %vm830, %v878
        %919 = vst.msk [vmem:[%s284 + $0x40] sm:$0xff] %vm830, %v880
        %920 = vst.msk [vmem:[%s284 + $0x48] sm:$0xff] %vm830, %v882
        %921 = vst.msk [vmem:[%s284 + $0x50] sm:$0xff] %vm830, %v884
        %922 = vst.msk [vmem:[%s284 + $0x58] sm:$0xff] %vm830, %v886
        %923 = vst.msk [vmem:[%s284 + $0x60] sm:$0xff] %vm830, %v888
        %924 = vst.msk [vmem:[%s284 + $0x68] sm:$0xff] %vm830, %v890
        %925 = vst.msk [vmem:[%s284 + $0x70] sm:$0xff] %vm830, %v892
        %926 = vst.msk [vmem:[%s284 + $0x78] sm:$0xff] %vm830, %v894
        %927 = vst.msk [vmem:[%s294] sm:$0xff] %vm830, %v783
        %928 = vst.msk [vmem:[%s294 + $0x8] sm:$0xff] %vm830, %v786
        %929 = vst.msk [vmem:[%s294 + $0x10] sm:$0xff] %vm830, %v789
        %930 = vst.msk [vmem:[%s294 + $0x18] sm:$0xff] %vm830, %v792
        %931 = vst.msk [vmem:[%s294 + $0x20] sm:$0xff] %vm830, %v795
        %932 = vst.msk [vmem:[%s294 + $0x28] sm:$0xff] %vm830, %v798
        %933 = vst.msk [vmem:[%s294 + $0x30] sm:$0xff] %vm830, %v801
        %934 = vst.msk [vmem:[%s294 + $0x38] sm:$0xff] %vm830, %v804
        %935 = vst.msk [vmem:[%s294 + $0x40] sm:$0xff] %vm830, %v807
        %936 = vst.msk [vmem:[%s294 + $0x48] sm:$0xff] %vm830, %v810
        %937 = vst.msk [vmem:[%s294 + $0x50] sm:$0xff] %vm830, %v813
        %938 = vst.msk [vmem:[%s294 + $0x58] sm:$0xff] %vm830, %v816
        %939 = vst.msk [vmem:[%s294 + $0x60] sm:$0xff] %vm830, %v819
        %940 = vst.msk [vmem:[%s294 + $0x68] sm:$0xff] %vm830, %v822
        %941 = vst.msk [vmem:[%s294 + $0x70] sm:$0xff] %vm830, %v825
        %942 = vst.msk [vmem:[%s294 + $0x78] sm:$0xff] %vm830, %v828
        %s943 = smul.u32 16, %s24
        %p944 = scmp.lt.s32.totalorder %s23, 1
        %s945 = scalar_select %p944, %s23, 1
        %p946 = scmp.lt.s32.totalorder %s943, 31
        %s947 = scalar_select %p946, %s943, 31
        %s948 = smul.addr %s945, 32
        %s949 = sadd.s32 %s947, %s948
        %s950 = smul.addr %s949, 8
        %s951 = scalar_lea.vmem %s2, %s950
        %s952 = smul.u32 16, %s24
        %p953 = scmp.lt.s32.totalorder %s23, 1
        %s954 = scalar_select %p953, %s23, 1
        %p955 = scmp.lt.s32.totalorder %s952, 31
        %s956 = scalar_select %p955, %s952, 31
        %s957 = smul.addr %s954, 32
        %s958 = sadd.s32 %s956, %s957
        %s959 = smul.addr %s958, 8
        %s960 = scalar_lea.vmem %s3, %s959
        %s961 = smul.u32 16, %s24
        %p962 = scmp.lt.s32.totalorder %s23, 1
        %s963 = scalar_select %p962, %s23, 1
        %p964 = scmp.lt.s32.totalorder %s961, 31
        %s965 = scalar_select %p964, %s961, 31
        %s966 = smul.addr %s963, 32
        %s967 = sadd.s32 %s965, %s966
        %s968 = smul.addr %s967, 8
        %s969 = scalar_lea.vmem %s4, %s968
        // Predicated region
        $region33: #{tpu_custom_call.1} parent=27 // pred_check
          %p970 = pneg %p100
        $region34: #{tpu_custom_call.1} parent=27 // pred_check_branch
          %972 = sbr.rel (%p970) target = $region36
        $region35: #{tpu_custom_call.1} parent=27 // pred_region
          %s973 = smul.u32 16, %s24
        $region36: #{tpu_custom_call.1} parent=27 // pred_fallthru
          _
        // Predicated region
        $region37: #{tpu_custom_call.1} parent=27 // pred_check
          %p974 = pneg %p128
        $region38: #{tpu_custom_call.1} parent=27 // pred_check_branch
          %976 = sbr.rel (%p974) target = $region40
        $region39: #{tpu_custom_call.1} parent=27 // pred_region
          %s977 = smul.u32 16, %s24
        $region40: #{tpu_custom_call.1} parent=27 // pred_fallthru
          _
        // Predicated region
        $region41: #{tpu_custom_call.1} parent=27 // pred_check
          %p978 = pneg %p156
        $region42: #{tpu_custom_call.1} parent=27 // pred_check_branch
          %980 = sbr.rel (%p978) target = $region44
        $region43: #{tpu_custom_call.1} parent=27 // pred_region
          %s981 = smul.u32 16, %s24
        $region44: #{tpu_custom_call.1} parent=27 // pred_fallthru
          _
      $region28: #{tpu_custom_call.1} parent=5 // pred_fallthru
        _
      %p982 = scmp.le.s32.totalorder 2, %s14
      // Predicated region
      $region45: #{tpu_custom_call.1} parent=5 // pred_check
        %p983 = pneg %p982
      $region46: #{tpu_custom_call.1} parent=5 // pred_check_branch
        %985 = sbr.rel (%p983) target = $region48
      $region47: #{tpu_custom_call.1} parent=5 // pred_region
        %s986 = ssub.s32 %s14, 2
        // Predicated region
        $region49: #{tpu_custom_call.1} parent=47 // pred_check
          %p987 = pneg %p106
        $region50: #{tpu_custom_call.1} parent=47 // pred_check_branch
          %989 = sbr.rel (%p987) target = $region52
        $region51: #{tpu_custom_call.1} parent=47 // pred_region
          %s990 = smul.u32 16, %s26
          %p991 = scmp.lt.s32.totalorder %s25, 1
          %s992 = scalar_select %p991, %s25, 1
          %p993 = scmp.lt.s32.totalorder %s990, 31
          %s994 = scalar_select %p993, %s990, 31
          %s995 = smul.addr %s992, 32
          %s996 = sadd.s32 %s994, %s995
          %s997 = smul.addr %s996, 8
          %s998 = scalar_lea.vmem %s2, %s997
        $region52: #{tpu_custom_call.1} parent=47 // pred_fallthru
          _
        // Predicated region
        $region53: #{tpu_custom_call.1} parent=47 // pred_check
          %p999 = pneg %p134
        $region54: #{tpu_custom_call.1} parent=47 // pred_check_branch
          %1001 = sbr.rel (%p999) target = $region56
        $region55: #{tpu_custom_call.1} parent=47 // pred_region
          %s1002 = smul.u32 16, %s26
          %p1003 = scmp.lt.s32.totalorder %s25, 1
          %s1004 = scalar_select %p1003, %s25, 1
          %p1005 = scmp.lt.s32.totalorder %s1002, 31
          %s1006 = scalar_select %p1005, %s1002, 31
          %s1007 = smul.addr %s1004, 32
          %s1008 = sadd.s32 %s1006, %s1007
          %s1009 = smul.addr %s1008, 8
          %s1010 = scalar_lea.vmem %s3, %s1009
        $region56: #{tpu_custom_call.1} parent=47 // pred_fallthru
          _
        // Predicated region
        $region57: #{tpu_custom_call.1} parent=47 // pred_check
          %p1011 = pneg %p162
        $region58: #{tpu_custom_call.1} parent=47 // pred_check_branch
          %1013 = sbr.rel (%p1011) target = $region60
        $region59: #{tpu_custom_call.1} parent=47 // pred_region
          %s1014 = smul.u32 16, %s26
          %p1015 = scmp.lt.s32.totalorder %s25, 1
          %s1016 = scalar_select %p1015, %s25, 1
          %p1017 = scmp.lt.s32.totalorder %s1014, 31
          %s1018 = scalar_select %p1017, %s1014, 31
          %s1019 = smul.addr %s1016, 32
          %s1020 = sadd.s32 %s1018, %s1019
          %s1021 = smul.addr %s1020, 8
          %s1022 = scalar_lea.vmem %s4, %s1021
        $region60: #{tpu_custom_call.1} parent=47 // pred_fallthru
          _
      $region48: #{tpu_custom_call.1} parent=5 // pred_fallthru
        _
    $region6: #{tpu_custom_call.1} parent=1 // loop_footer
      %s18 = sadd.s32 1, %s14
    $region7: #{tpu_custom_call.1} parent=1 // loop_footer_branch
      %13 = sbr.rel target = $region3
    $region8: #{tpu_custom_call.1} parent=1 // loop_exit
      _
    %1023 = vsyncpa [#allocation3], 1
    %s1024 = scalar_lea.sflag [#allocation3], 1
    %1025 = vsyncpa %s1024, 1

</llo_original>
